<compile_context>
chip_gen: v7x
topology: tpu7x:2x2x1
jax: 0.10.0
libtpu: 0.0.40
codegen_flags: <defaults>
</compile_context>

<pallas_src>
import functools

import jax
import jax.numpy as jnp
from jax.experimental import pallas as pl
from jax.experimental.pallas import tpu as pltpu

GAMMA = 5
EPS = 1e-7

# Row cap: (tile_n, 1) per-row temporaries are lane-padded to 128 lanes, so
# rows cannot grow unboundedly even for tiny C.  8192 rows keeps those skinny
# temporaries at a few MiB while still giving >= 1 MiB logits tiles at C=32 f32.
_MAX_TILE_ROWS = 8192
# Row count used when sizing tile_c on the class-tiled (vocab-scale C) path.
_CTILE_ROWS = 256


def _round_up(v, m):
    return ((v + m - 1) // m) * m


def _vmem_config():
    """Returns (per-buffer tile byte budget, vmem_limit_bytes) for this TPU."""
    cap = 64 * 1024 * 1024                     # conservative default (v7x-sized VMEM)
    try:
        info = pltpu.get_tpu_info()
        cap = int(getattr(info, "vmem_capacity_bytes", cap) or cap)
    except Exception:
        pass
    if cap >= 96 * 1024 * 1024:                # v5e / v6e: 128 MiB physical VMEM
        return 12 * 1024 * 1024, 64 * 1024 * 1024
    return 6 * 1024 * 1024, 48 * 1024 * 1024   # v7x (64 MiB) or unknown


def _choose_tiles(n, c, itemsize, budget, tile_n, tile_c):
    # Sub-32-bit dtypes pack 2/4 rows per sublane: keep row tiles a multiple of
    # the packed sublane count (8 for f32, 16 for bf16, 32 for int8/fp8).
    row_mult = 8 * max(1, 4 // itemsize)

    # --- class (lane) axis ---
    if tile_c is None:
        if c * itemsize * row_mult <= budget:
            tile_c = c                              # common case: full row per block
        else:                                       # vocab-scale C: flash-style blocks
            tile_c = (budget // (_CTILE_ROWS * itemsize)) // 128 * 128
    if tile_c >= c or c <= 128:
        tile_c = c
    else:
        tile_c = max(128, (tile_c // 128) * 128)    # multiple of 128 lanes

    # --- row (sublane) axis ---
    if tile_n is None:
        tile_n = min(_MAX_TILE_ROWS, budget // max(1, tile_c * itemsize))
    tile_n = max(row_mult, _round_up(tile_n, row_mult))
    if tile_n >= n:
        if n >= 2 * row_mult:
            # >= 2 row tiles so the "parallel" row axis can feed both
            # TensorCores on v7x (harmless on single-TC v5e/v6e).
            tile_n = _round_up(pl.cdiv(n, 2), row_mult)
        else:
            tile_n = n                              # single full-extent block (legal)
    return tile_n, tile_c


def _finalize_rows(p_num, denom, o_ref, row_tile, n_rows, tile_n, gamma, eps):
    # Focal loss on (tile_n, 1) vectors only.  Clamping p_t is equivalent to
    # clamping all of softmax(x) because only target entries contribute.
    p_t = jnp.clip(p_num / denom, eps, 1.0 - eps)
    row_loss = -jnp.log(p_t) * (1.0 - p_t) ** gamma                  # (tile_n, 1)

    # Mask rows of the (padded) last partial row tile with a SELECT so garbage
    # / NaN in padded rows never propagates.
    row = jax.lax.broadcasted_iota(jnp.int32, (tile_n, 1), 0)
    valid = (row_tile * tile_n + row) < n_rows
    row_loss = jnp.where(valid, row_loss, 0.0)

    # One lane-dense partial-sum block per row tile (parallel grid axis).
    partial = jnp.sum(row_loss)
    o_ref[...] = jnp.broadcast_to(partial, o_ref.shape).astype(jnp.float32)


def _focal_loss_kernel(x_ref, t_ref, o_ref, *scratch,
                       n_rows, n_cols, tile_n, tile_c, gamma, eps, multi_c):
    i = pl.program_id(0)                           # row tile      ("parallel")

    x = x_ref[...]                                 # (tile_n, tile_c), native dtype
    t = t_ref[...]                                 # (tile_n, 1) int32
    col = jax.lax.broadcasted_iota(jnp.int32, (tile_n, tile_c), 1)

    if multi_c:
        j = pl.program_id(1)                       # class tile    ("arbitrary")
        col = col + j * tile_c                     # global class index
        if n_cols % tile_c:                        # mask padded tail classes
            x = jnp.where(col < n_cols, x, jnp.array(-jnp.inf, dtype=x.dtype))

    # Block-local softmax pieces.  Row max runs on the native dtype; only the
    # exp operand is cast to f32, and the target gather reads the exp block so
    # the raw logits tile dies immediately after the exp.
    m_blk = jnp.max(x, axis=-1, keepdims=True)                       # (tile_n, 1)
    e = jnp.exp((x - m_blk).astype(jnp.float32))                     # (tile_n, tile_c) f32
    s_blk = jnp.sum(e, axis=-1, keepdims=True)                       # denom piece
    p_blk = jnp.sum(jnp.where(col == t, e, 0.0), axis=-1, keepdims=True)  # target piece
    m_blk = m_blk.astype(jnp.float32)

    if not multi_c:
        _finalize_rows(p_blk, s_blk, o_ref, i, n_rows, tile_n, gamma, eps)
        return

    # Online (flash-style) logsumexp carried across class tiles in VMEM scratch.
    m_sc, d_sc, p_sc = scratch

    @pl.when(j == 0)
    def _():
        m_sc[...] = m_blk
        d_sc[...] = s_blk
        p_sc[...] = p_blk

    @pl.when(j > 0)
    def _():
        m_new = jnp.maximum(m_sc[...], m_blk)
        c_old = jnp.exp(m_sc[...] - m_new)
        c_blk = jnp.exp(m_blk - m_new)
        d_sc[...] = c_old * d_sc[...] + c_blk * s_blk
        p_sc[...] = c_old * p_sc[...] + c_blk * p_blk
        m_sc[...] = m_new

    @pl.when(j == pl.num_programs(1) - 1)
    def _():
        _finalize_rows(p_sc[...], d_sc[...], o_ref, i, n_rows, tile_n, gamma, eps)


def focal_loss(x, target, *, gamma=GAMMA, eps=EPS, size_average=False,
               tile_n=None, tile_c=None):
    """x: (N, C) logits (f32 or bf16), target: (N,) int labels -> scalar f32.

    Matches FocalLoss(gamma, eps, size_average).forward(x, target).
    Target labels are assumed to lie in [0, C); out-of-range labels are not
    validated here (PyTorch's scatter_-based one_hot would error on them).
    """
    n, c = x.shape
    itemsize = jnp.dtype(x.dtype).itemsize
    budget, vmem_limit = _vmem_config()
    tile_n, tile_c = _choose_tiles(n, c, itemsize, budget, tile_n, tile_c)

    num_row_tiles = pl.cdiv(n, tile_n)
    num_c_tiles = pl.cdiv(c, tile_c)
    multi_c = num_c_tiles > 1

    t2d = target.astype(jnp.int32).reshape(n, 1)

    kernel = functools.partial(
        _focal_loss_kernel, n_rows=n, n_cols=c, tile_n=tile_n, tile_c=tile_c,
        gamma=gamma, eps=eps, multi_c=multi_c)

    scratch = ([pltpu.VMEM((tile_n, 1), jnp.float32)] * 3) if multi_c else []

    partials = pl.pallas_call(
        kernel,
        out_shape=jax.ShapeDtypeStruct((num_row_tiles, 8, 128), jnp.float32),
        grid=(num_row_tiles, num_c_tiles),
        in_specs=[
            pl.BlockSpec((tile_n, tile_c), lambda i, j: (i, j)),
            pl.BlockSpec((tile_n, 1), lambda i, j: (i, 0)),
        ],
        out_specs=pl.BlockSpec((1, 8, 128), lambda i, j: (i, 0, 0)),
        scratch_shapes=scratch,
        compiler_params=pltpu.CompilerParams(
            dimension_semantics=("parallel", "arbitrary"),
            vmem_limit_bytes=vmem_limit,
        ),
        cost_estimate=pl.CostEstimate(
            flops=6 * n * c,
            transcendentals=n * c + 4 * n,
            bytes_accessed=n * c * itemsize + 4 * n + num_row_tiles * 8 * 128 * 4,
        ),
    )(x, t2d)

    # Tiny final reduction over the per-row-tile partial sums in plain JAX.
    total = jnp.sum(partials[:, 0, 0])
    if size_average:                    # torch .mean() over the full (N, C) loss tensor
        total = total / (n * c)
    return total


def focal_loss_ref(x, target, gamma=GAMMA, eps=EPS, size_average=False):
    """Plain-JAX reference mirroring the PyTorch module (for verification)."""
    _, c = x.shape
    p = jax.nn.softmax(x.astype(jnp.float32), axis=-1)
    p = jnp.clip(p, eps, 1.0 - eps)
    y = jax.nn.one_hot(target, c, dtype=jnp.float32)
    loss = -y * jnp.log(p) * (1.0 - p) ** gamma
    return jnp.mean(loss) if size_average else jnp.sum(loss)


if __name__ == "__main__":
    key = jax.random.PRNGKey(0)
    kx, kt, kx2, kt2, kx3, kt3 = jax.random.split(key, 6)

    # 1) Small logits batch (matches the module's 2-D input contract).
    N, C = 8, 32
    x = jax.random.normal(kx, (N, C), dtype=jnp.float32)
    target = jax.random.randint(kt, (N,), 0, C, dtype=jnp.int32)
    out = jax.block_until_ready(focal_loss(x, target))
    ref = focal_loss_ref(x, target)
    assert jnp.allclose(out, ref, rtol=1e-5, atol=1e-5), (out, ref)

    # 2) Multi row-tile path with a ragged last tile (masking + parallel axis).
    N2, C2 = 50, 128
    x2 = jax.random.normal(kx2, (N2, C2), dtype=jnp.float32)
    target2 = jax.random.randint(kt2, (N2,), 0, C2, dtype=jnp.int32)
    out2 = jax.block_until_ready(focal_loss(x2, target2, tile_n=16))
    ref2 = focal_loss_ref(x2, target2)
    assert jnp.allclose(out2, ref2, rtol=1e-5, atol=1e-4), (out2, ref2)

    # 3) Class-tiled path (online logsumexp) with padded tail classes and rows.
    N3, C3 = 24, 200
    x3 = jax.random.normal(kx3, (N3, C3), dtype=jnp.float32)
    target3 = jax.random.randint(kt3, (N3,), 0, C3, dtype=jnp.int32)
    out3 = jax.block_until_ready(focal_loss(x3, target3, tile_n=16, tile_c=128))
    ref3 = focal_loss_ref(x3, target3)
    assert jnp.allclose(out3, ref3, rtol=1e-5, atol=1e-4), (out3, ref3)

    print("KERNEL_OK")
</pallas_src>

<mosaic_0001>
module attributes {stable_mosaic.version = 11 : i64} {
  func.func @_focal_loss_kernel(%arg0: i32, %arg1: i32, %arg2: memref<8x32xf32, #tpu.memory_space<vmem>>, %arg3: memref<8x1xi32, #tpu.memory_space<vmem>>, %arg4: memref<1x8x128xf32, #tpu.memory_space<vmem>>) attributes {dimension_semantics = [#tpu.dimension_semantics<parallel>, #tpu.dimension_semantics<arbitrary>], iteration_bounds = array<i64: 1, 1>, scalar_prefetch = 0 : i64, scratch_operands = 0 : i64, tpu.core_type = #tpu.core_type<tc>, window_params = [{transform_indices = @transform_0, window_bounds = array<i64: 8, 32>}, {transform_indices = @transform_1, window_bounds = array<i64: 8, 1>}, {transform_indices = @transform_2, window_bounds = array<i64: 1, 8, 128>}]} {
    %c0 = arith.constant 0 : index
    %c0_0 = arith.constant 0 : index
    %0 = vector.load %arg2[%c0, %c0_0] : memref<8x32xf32, #tpu.memory_space<vmem>>, vector<8x32xf32>
    %c0_1 = arith.constant 0 : index
    %c0_2 = arith.constant 0 : index
    %1 = vector.load %arg3[%c0_1, %c0_2] : memref<8x1xi32, #tpu.memory_space<vmem>>, vector<8x1xi32>
    %2 = tpu.iota {dimensions = array<i32: 1>} : vector<8x32xi32>
    %cst = arith.constant dense<0xFF800000> : vector<8xf32>
    %3 = vector.multi_reduction <maximumf>, %0, %cst [1] : vector<8x32xf32> to vector<8xf32>
    %4 = vector.shape_cast %3 : vector<8xf32> to vector<8x1xf32>
    %5 = vector.broadcast %4 : vector<8x1xf32> to vector<8x32xf32>
    %6 = arith.subf %0, %5 : vector<8x32xf32>
    %7 = math.exp %6 : vector<8x32xf32>
    %cst_3 = arith.constant dense<0.000000e+00> : vector<8xf32>
    %8 = vector.multi_reduction <add>, %7, %cst_3 [1] : vector<8x32xf32> to vector<8xf32>
    %9 = vector.shape_cast %8 : vector<8xf32> to vector<8x1xf32>
    %10 = vector.broadcast %1 : vector<8x1xi32> to vector<8x32xi32>
    %11 = arith.cmpi eq, %2, %10 : vector<8x32xi32>
    %cst_4 = arith.constant 0.000000e+00 : f32
    %12 = vector.broadcast %cst_4 : f32 to vector<8x32xf32>
    %13 = arith.select %11, %7, %12 : vector<8x32xi1>, vector<8x32xf32>
    %cst_5 = arith.constant dense<0.000000e+00> : vector<8xf32>
    %14 = vector.multi_reduction <add>, %13, %cst_5 [1] : vector<8x32xf32> to vector<8xf32>
    %15 = vector.shape_cast %14 : vector<8xf32> to vector<8x1xf32>
    %16 = arith.divf %15, %9 : vector<8x1xf32>
    %cst_6 = arith.constant 1.000000e-07 : f32
    %cst_7 = arith.constant 0.99999988 : f32
    %17 = vector.broadcast %cst_6 : f32 to vector<8x1xf32>
    %18 = arith.maximumf %17, %16 : vector<8x1xf32>
    %19 = vector.broadcast %cst_7 : f32 to vector<8x1xf32>
    %20 = arith.minimumf %19, %18 : vector<8x1xf32>
    %21 = math.log %20 : vector<8x1xf32>
    %cst_8 = arith.constant 0.000000e+00 : f32
    %22 = vector.broadcast %cst_8 : f32 to vector<8x1xf32>
    %23 = arith.subf %22, %21 : vector<8x1xf32>
    %cst_9 = arith.constant 1.000000e+00 : f32
    %24 = vector.broadcast %cst_9 : f32 to vector<8x1xf32>
    %25 = arith.subf %24, %20 : vector<8x1xf32>
    %26 = arith.mulf %25, %25 : vector<8x1xf32>
    %27 = arith.mulf %26, %26 : vector<8x1xf32>
    %28 = arith.mulf %25, %27 : vector<8x1xf32>
    %29 = arith.mulf %23, %28 : vector<8x1xf32>
    %30 = tpu.iota {dimensions = array<i32: 0>} : vector<8x1xi32>
    %c8_i32 = arith.constant 8 : i32
    %31 = arith.muli %arg0, %c8_i32 : i32
    %32 = vector.broadcast %31 : i32 to vector<8x1xi32>
    %33 = arith.addi %32, %30 : vector<8x1xi32>
    %c8_i32_10 = arith.constant 8 : i32
    %34 = vector.broadcast %c8_i32_10 : i32 to vector<8x1xi32>
    %35 = arith.cmpi slt, %33, %34 : vector<8x1xi32>
    %cst_11 = arith.constant 0.000000e+00 : f32
    %36 = vector.broadcast %cst_11 : f32 to vector<8x1xf32>
    %37 = arith.select %35, %29, %36 : vector<8x1xi1>, vector<8x1xf32>
    %38 = vector.shape_cast %37 : vector<8x1xf32> to vector<1x8x1xf32>
    %cst_12 = arith.constant dense<0.000000e+00> : vector<1xf32>
    %39 = vector.multi_reduction <add>, %38, %cst_12 [1, 2] : vector<1x8x1xf32> to vector<1xf32>
    %40 = vector.shape_cast %39 : vector<1xf32> to vector<1x1x1xf32>
    %41 = vector.extract %40[0, 0, 0] : f32 from vector<1x1x1xf32>
    %42 = vector.broadcast %41 : f32 to vector<1x8x128xf32>
    %c0_13 = arith.constant 0 : index
    %c0_14 = arith.constant 0 : index
    %c0_15 = arith.constant 0 : index
    %43 = vector.load %arg4[%c0_13, %c0_14, %c0_15] : memref<1x8x128xf32, #tpu.memory_space<vmem>>, vector<1x8x128xf32>
    tpu.vector_store %arg4[%c0_13, %c0_14, %c0_15], %42 {strides = array<i32>} : memref<1x8x128xf32, #tpu.memory_space<vmem>>, vector<1x8x128xf32>,
    return
  }
  func.func @transform_0(%arg0: i32, %arg1: i32) -> (i32, i32) {
    %c0_i32 = arith.constant 0 : i32
    return %arg0, %arg1 : i32, i32
  }
  func.func @transform_1(%arg0: i32, %arg1: i32) -> (i32, i32) {
    %c0_i32 = arith.constant 0 : i32
    %c0_i32_0 = arith.constant 0 : i32
    return %arg0, %c0_i32 : i32, i32
  }
  func.func @transform_2(%arg0: i32, %arg1: i32) -> (i32, i32, i32) {
    %c0_i32 = arith.constant 0 : i32
    %c0_i32_0 = arith.constant 0 : i32
    %c0_i32_1 = arith.constant 0 : i32
    return %arg0, %c0_i32, %c0_i32_0 : i32, i32, i32
  }
}

</mosaic_0001>

<llo_original>
// kernel: tpu_custom_call.1
$region0: #{tpu_custom_call.1}
  #allocation0 [shape = 'u32[]', space=smem, size = 0x4, offset = 0x4, fixed_abs, tag = 'smem constant byte address 0x4 - core index']
  #allocation1 [shape = 'u32[144,128]{1,0:T(1,128)}', space=vmem, size = 0x12000, scoped, tag = 'internal scratch']
  %s0 = inlined_call_operand.vmem [shape: f32[8,32], index: 0, kind: input, shape index: {}]
  %s1 = inlined_call_operand.vmem [shape: s32[8,1], index: 1, kind: input, shape index: {}]
  %s2 = inlined_call_operand.hbm [shape: f32[1,8,128], index: 2, kind: output, shape index: {}]
  %s3 = sld [smem:[#allocation0]]
  $region18: #{tpu_custom_call.1} parent=0
    _
  %s5 = ssub.s32 1, %s3
  %s6 = scalar_select 0, %s5, %s3
  $region1: #{tpu_custom_call.1} parent=0
    #allocation2 [shape = 'u8[4096]{0}', space=vmem, size = 0x1000, scoped, tag = 'output window, operand 0, single buffered']
    #allocation3 [shape = 's32[1]{0}', space=sflag, size = 0x4, scoped, tag = 'scoped memory for tpu_custom_call.1']
    %7 = vsyncpa [#allocation3], 0
    // Predicated region
    $region2: #{tpu_custom_call.1} parent=1 // pred_check
      _
    $region3: #{tpu_custom_call.1} parent=1 // pred_check_branch
      %9 = sbr.rel (0) target = $region5
    $region4: #{tpu_custom_call.1} parent=1 // pred_region
      _
    $region5: #{tpu_custom_call.1} parent=1 // pred_fallthru
      _
    // Predicated region
    $region6: #{tpu_custom_call.1} parent=1 // pred_check
      _
    $region7: #{tpu_custom_call.1} parent=1 // pred_check_branch
      %11 = sbr.rel (0) target = $region9
    $region8: #{tpu_custom_call.1} parent=1 // pred_region
      _
    $region9: #{tpu_custom_call.1} parent=1 // pred_fallthru
      _
    %v12 = vld [vmem:[%s0] sm:$0xff]
    %v13 = vld [vmem:[%s1] sm:$0xff]
    %v14 = vlaneseq
    %v15 = vand.u32 %v14, 127
    %vm16 = vcmask 261120
    %v17 = vsel %vm16, %v12, -inf
    %18 = vmax.xlane.f32.xlu0 %v17
    %v19 = vpop.xlane.xlu0 %18
    %v20 = vsub.f32 %v12, %v19
    %v21 = vmul.f32 %v20, 1.442695
    %v22 = vpow.pop %v21
    %v23 = vsel %vm16, %v22, 0.0
    %24 = vadd.xlane.f32.xlu0 %v23
    %v25 = vpop.xlane.xlu0 %24
    %26 = vset.pattern.permute.xlu0 0
    %27 = vperm.xlu0 %26, %v13
    %v28 = vpop.permute.xlu0 %27
    %vm29 = vcmp.eq.s32.totalorder %v15, %v28
    %v30 = vsel %vm29, %v22, 0.0
    %v31 = vsel %vm16, %v30, 0.0
    %32 = vadd.xlane.f32.xlu0 %v31
    %v33 = vpop.xlane.xlu0 %32
    %v34 = vrcp.pop %v25
    %v35 = vmul.f32 %v33, %v34
    %v36 = vmax.f32 %v35, 1e-07
    %v37 = vmin.f32 %v36, 0.9999999
    %v38 = vlog2.pop %v37
    %v39 = vmul.f32 %v38, 0.6931472
    %v40 = vsub.f32 0.0, %v39
    %v41 = vsub.f32 1.0, %v37
    %v42 = vmul.f32 %v41, %v41
    %v43 = vmul.f32 %v42, %v42
    %v44 = vmul.f32 %v41, %v43
    %v45 = vmul.f32 %v40, %v44
    %v46 = vlaneseq
    %v47 = vshrl.u32 %v46, 7
    %s48 = smul.u32 0, 8
    %v49 = vstv %s48
    %v50 = vadd.s32 %v49, %v47
    %vm51 = vcmp.lt.s32.totalorder %v50, 8
    %v52 = vsel %vm51, %v45, 0.0
    %vm53 = vcmask 7168
    %v54 = vsel %vm53, %v52, 0.0
    %55 = vadd.xlane.f32.xlu0 %v54
    %v56 = vpop.xlane.xlu0 %55
    %v57 = vrot.slane %v56, 4
    %v58 = vadd.f32 %v56, %v57
    %v59 = vrot.slane %v58, 2
    %v60 = vadd.f32 %v58, %v59
    %v61 = vrot.slane %v60, 1
    %v62 = vadd.f32 %v60, %v61
    %s63 = vtos %v62
    %v64 = vstv %s63
    %65 = vst [vmem:[#allocation2] sm:$0xff] %v64
    // Predicated region
    $region10: #{tpu_custom_call.1} parent=1 // pred_check
      _
    $region11: #{tpu_custom_call.1} parent=1 // pred_check_branch
      %67 = sbr.rel (0) target = $region13
    $region12: #{tpu_custom_call.1} parent=1 // pred_region
      %s69 = ssub.s32 128, 128
      %70 = vsyncadd [#allocation3], %s69
      %s72 = sshll.u32 [#allocation2], 4
      %s73 = int_to_ptr.vmem [resolvable:$true] %s72
      %75 = dma.vmem_to_hbm [thread:$0]  %s73, 128, %s2, [#allocation3]
    $region13: #{tpu_custom_call.1} parent=1 // pred_fallthru
      _
    // Predicated region
    $region14: #{tpu_custom_call.1} parent=1 // pred_check
      _
    $region15: #{tpu_custom_call.1} parent=1 // pred_check_branch
      %77 = sbr.rel (0) target = $region17
    $region16: #{tpu_custom_call.1} parent=1 // pred_region
      %78 = dma.done [#allocation3], 128
    $region17: #{tpu_custom_call.1} parent=1 // pred_fallthru
      _
    %79 = vsyncpa [#allocation3], 1

</llo_original>
